<compile_context>
chip_gen: v7x
topology: tpu7x:2x2x1
jax: 0.10.0
libtpu: 0.0.40
codegen_flags: <defaults>
</compile_context>

<pallas_src>
import functools

import numpy as np
import jax
import jax.numpy as jnp
from jax import lax
from jax.experimental import pallas as pl
from jax.experimental.pallas import tpu as pltpu


# 32 MiB: plenty for these tiles, and safe on v7x (64 MiB physical VMEM) as
# well as v5e/v6e (128 MiB).
_VMEM_LIMIT = 32 * 1024 * 1024


def _pick_tile(dim, target, align):
    """Largest multiple of `align` <= target that divides `dim`; else full dim.

    NOTE: silently falls back to the full dimension for awkward (prime-ish)
    sizes; fine for the shapes used here.
    """
    if dim <= target:
        return dim
    t = (target // align) * align
    while t >= align:
        if dim % t == 0:
            return t
        t -= align
    return dim


def _sublane_align(dtype):
    return 16 if jnp.dtype(dtype) == jnp.dtype(jnp.bfloat16) else 8


# ---------------------------------------------------------------------------
# Fused QKV projection: one x read drives three bf16 matmuls.
#   x2d: (M, K) f32   wq/wk/wv: (K, N) bf16   ->   q, k, v: (M, N) bf16
# ---------------------------------------------------------------------------

def _qkv_matmul_kernel(x_ref, wq_ref, wk_ref, wv_ref, q_ref, k_ref, v_ref,
                       acc_q, acc_k, acc_v, *, compute_dtype):
    @pl.when(pl.program_id(2) == 0)
    def _init():
        acc_q[...] = jnp.zeros(acc_q.shape, acc_q.dtype)
        acc_k[...] = jnp.zeros(acc_k.shape, acc_k.dtype)
        acc_v[...] = jnp.zeros(acc_v.shape, acc_v.dtype)

    # x is read from HBM once (f32) and cast to bf16 for the MXU here; this
    # avoids a separate cast pass over the activations.
    x = x_ref[...].astype(compute_dtype)
    acc_q[...] += jnp.dot(x, wq_ref[...], preferred_element_type=jnp.float32)
    acc_k[...] += jnp.dot(x, wk_ref[...], preferred_element_type=jnp.float32)
    acc_v[...] += jnp.dot(x, wv_ref[...], preferred_element_type=jnp.float32)

    @pl.when(pl.program_id(2) == pl.num_programs(2) - 1)
    def _done():
        q_ref[...] = acc_q[...].astype(q_ref.dtype)
        k_ref[...] = acc_k[...].astype(k_ref.dtype)
        v_ref[...] = acc_v[...].astype(v_ref.dtype)


def qkv_projection(x2d, wq, wk, wv, *, tm_target=512, tn_target=512,
                   tk_target=512):
    M, K = x2d.shape
    K2, N = wq.shape
    assert K == K2 and wk.shape == (K, N) and wv.shape == (K, N)
    compute_dtype = wq.dtype

    tm = _pick_tile(M, tm_target, _sublane_align(compute_dtype))
    tn = _pick_tile(N, tn_target, 128)
    tk = _pick_tile(K, tk_target, 128)
    grid = (M // tm, N // tn, K // tk)

    cost = pl.CostEstimate(
        flops=3 * 2 * M * N * K,
        transcendentals=0,
        bytes_accessed=(M * K * x2d.dtype.itemsize
                        + 3 * K * N * wq.dtype.itemsize
                        + 3 * M * N * jnp.dtype(compute_dtype).itemsize),
    )

    kernel = functools.partial(_qkv_matmul_kernel, compute_dtype=compute_dtype)
    w_spec = pl.BlockSpec((tk, tn), lambda i, j, k: (k, j))
    out_spec = pl.BlockSpec((tm, tn), lambda i, j, k: (i, j))

    return pl.pallas_call(
        kernel,
        out_shape=tuple(jax.ShapeDtypeStruct((M, N), compute_dtype)
                        for _ in range(3)),
        grid_spec=pltpu.PrefetchScalarGridSpec(
            num_scalar_prefetch=0,
            grid=grid,
            in_specs=[
                pl.BlockSpec((tm, tk), lambda i, j, k: (i, k)),
                w_spec, w_spec, w_spec,
            ],
            out_specs=[out_spec, out_spec, out_spec],
            scratch_shapes=[pltpu.VMEM((tm, tn), jnp.float32)] * 3,
        ),
        compiler_params=pltpu.CompilerParams(
            dimension_semantics=("parallel", "parallel", "arbitrary"),
            vmem_limit_bytes=_VMEM_LIMIT,
        ),
        cost_estimate=cost,
    )(x2d, wq, wk, wv)


# ---------------------------------------------------------------------------
# Generic tiled matmul (bias-free Linear), used for the output projection.
# ---------------------------------------------------------------------------

def _matmul_kernel_accout(x_ref, w_ref, o_ref):
    # f32 output block is resident across the k axis: accumulate directly.
    @pl.when(pl.program_id(2) == 0)
    def _init():
        o_ref[...] = jnp.zeros(o_ref.shape, o_ref.dtype)

    o_ref[...] += jnp.dot(x_ref[...], w_ref[...],
                          preferred_element_type=jnp.float32)


def _matmul_kernel_scratch(x_ref, w_ref, o_ref, acc_ref):
    @pl.when(pl.program_id(2) == 0)
    def _init():
        acc_ref[...] = jnp.zeros(acc_ref.shape, acc_ref.dtype)

    acc_ref[...] += jnp.dot(x_ref[...], w_ref[...],
                            preferred_element_type=jnp.float32)

    @pl.when(pl.program_id(2) == pl.num_programs(2) - 1)
    def _done():
        o_ref[...] = acc_ref[...].astype(o_ref.dtype)


def linear_no_bias(x2d, w, *, out_dtype=None, tm_target=512, tn_target=512,
                   tk_target=512):
    """y = x2d @ w.  x2d: (M, K), w: (K, N) -> (M, N)."""
    M, K = x2d.shape
    K2, N = w.shape
    assert K == K2
    out_dtype = x2d.dtype if out_dtype is None else out_dtype

    tm = _pick_tile(M, tm_target, _sublane_align(x2d.dtype))
    tn = _pick_tile(N, tn_target, 128)
    tk = _pick_tile(K, tk_target, 128)
    grid = (M // tm, N // tn, K // tk)

    cost = pl.CostEstimate(
        flops=2 * M * N * K,
        transcendentals=0,
        bytes_accessed=(M * K * x2d.dtype.itemsize
                        + K * N * w.dtype.itemsize
                        + M * N * jnp.dtype(out_dtype).itemsize),
    )

    f32_out = jnp.dtype(out_dtype) == jnp.dtype(jnp.float32)
    kernel = _matmul_kernel_accout if f32_out else _matmul_kernel_scratch
    scratch = [] if f32_out else [pltpu.VMEM((tm, tn), jnp.float32)]

    return pl.pallas_call(
        kernel,
        out_shape=jax.ShapeDtypeStruct((M, N), out_dtype),
        grid_spec=pltpu.PrefetchScalarGridSpec(
            num_scalar_prefetch=0,
            grid=grid,
            in_specs=[
                pl.BlockSpec((tm, tk), lambda i, j, k: (i, k)),
                pl.BlockSpec((tk, tn), lambda i, j, k: (k, j)),
            ],
            out_specs=pl.BlockSpec((tm, tn), lambda i, j, k: (i, j)),
            scratch_shapes=scratch,
        ),
        compiler_params=pltpu.CompilerParams(
            dimension_semantics=("parallel", "parallel", "arbitrary"),
            vmem_limit_bytes=_VMEM_LIMIT,
        ),
        cost_estimate=cost,
    )(x2d, w)


# ---------------------------------------------------------------------------
# Flash-style multi-head attention.
#   q, k, v: (B, T, H*Dh) head-major packed (scale folded into q) -> (B, T, H*Dh)
# ---------------------------------------------------------------------------

def _flash_mhsa_kernel(q_ref, k_ref, v_ref, o_ref, m_ref, l_ref, acc_ref,
                       *, heads, dim_head, group_heads):
    j = pl.program_id(2)
    tq = acc_ref.shape[0]

    @pl.when(j == 0)
    def _init():
        m_ref[...] = jnp.full(m_ref.shape, -jnp.inf, m_ref.dtype)
        l_ref[...] = jnp.zeros(l_ref.shape, l_ref.dtype)
        acc_ref[...] = jnp.zeros(acc_ref.shape, acc_ref.dtype)

    n_groups = heads // group_heads
    g_lanes = group_heads * dim_head

    for g in range(n_groups):
        alpha_cols = []
        pv_cols = []
        for hh in range(group_heads):
            h = g * group_heads + hh
            lo = h * dim_head
            qh = q_ref[0, :, lo:lo + dim_head]   # bf16, scale already folded in
            kh = k_ref[0, :, lo:lo + dim_head]
            vh = v_ref[0, :, lo:lo + dim_head]

            # s = qh @ kh^T without materializing k.T.
            # TODO(synk): check the bundle for a per-head vxpose of kh; if the
            # XLU contends, transpose K once per KV block outside this loop.
            s = lax.dot_general(qh, kh, (((1,), (1,)), ((), ())),
                                preferred_element_type=jnp.float32)  # (tq, tk)

            m_prev = m_ref[:, h:h + 1]
            m_new = jnp.maximum(m_prev, jnp.max(s, axis=-1, keepdims=True))
            alpha = jnp.exp(m_prev - m_new)
            # NOTE(v6e): if the bundle shows EUP saturation, this exp could be
            # computed in bf16; kept f32 for accuracy.
            p = jnp.exp(s - m_new)

            l_ref[:, h:h + 1] = (alpha * l_ref[:, h:h + 1]
                                 + jnp.sum(p, axis=-1, keepdims=True))
            m_ref[:, h:h + 1] = m_new

            pv = jnp.dot(p.astype(vh.dtype), vh,
                         preferred_element_type=jnp.float32)  # (tq, Dh) f32
            alpha_cols.append(jnp.broadcast_to(alpha, (tq, dim_head)))
            pv_cols.append(pv)

        if group_heads == 1:
            alpha_g, pv_g = alpha_cols[0], pv_cols[0]
        else:
            alpha_g = jnp.concatenate(alpha_cols, axis=-1)
            pv_g = jnp.concatenate(pv_cols, axis=-1)

        glo = g * g_lanes
        # Single lane-dense (multiple of 128 lanes, or full-extent) RMW.
        acc_ref[:, glo:glo + g_lanes] = (
            alpha_g * acc_ref[:, glo:glo + g_lanes] + pv_g)

    @pl.when(j == pl.num_programs(2) - 1)
    def _finalize():
        inv_l = 1.0 / l_ref[...]             # exact; runs once per q tile
        inv_full = jnp.concatenate(
            [jnp.broadcast_to(inv_l[:, h:h + 1], (tq, dim_head))
             for h in range(heads)], axis=-1)        # lane-dense (tq, H*Dh)
        o_ref[0] = (acc_ref[...] * inv_full).astype(o_ref.dtype)


def flash_mhsa(q, k, v, heads, dim_head, *, tq_target=512, tk_target=128):
    B, T, HD = q.shape
    assert HD == heads * dim_head
    sub = _sublane_align(q.dtype)
    tq = _pick_tile(T, tq_target, sub)
    tk = _pick_tile(T, tk_target, sub)
    # Leading "parallel" axis = q tiles (better 2-TC balance on v7x when B is tiny).
    grid = (T // tq, B, T // tk)

    # Heads per inner iteration so the acc RMW spans a 128-lane multiple
    # (or the full H*Dh extent).
    if HD <= 128:
        group = heads
    elif dim_head % 128 == 0:
        group = 1
    elif (128 % dim_head == 0) and (heads % (128 // dim_head) == 0):
        group = 128 // dim_head
    else:
        group = 1  # misaligned fallback; still correct

    itemsize = q.dtype.itemsize
    cost = pl.CostEstimate(
        flops=4 * B * heads * T * T * dim_head,
        transcendentals=B * heads * T * T,
        # K/V are re-read once per q tile.
        bytes_accessed=(2 * B * T * HD + 2 * B * T * HD * (T // tq)) * itemsize,
    )

    q_spec = pl.BlockSpec((1, tq, HD), lambda i, b, j: (b, i, 0))
    kv_spec = pl.BlockSpec((1, tk, HD), lambda i, b, j: (b, j, 0))
    out_spec = pl.BlockSpec((1, tq, HD), lambda i, b, j: (b, i, 0))

    kernel = functools.partial(_flash_mhsa_kernel, heads=heads,
                               dim_head=dim_head, group_heads=group)
    return pl.pallas_call(
        kernel,
        out_shape=jax.ShapeDtypeStruct((B, T, HD), q.dtype),
        grid_spec=pltpu.PrefetchScalarGridSpec(
            num_scalar_prefetch=0,
            grid=grid,
            in_specs=[q_spec, kv_spec, kv_spec],
            out_specs=out_spec,
            scratch_shapes=[
                pltpu.VMEM((tq, heads), jnp.float32),   # running max m
                pltpu.VMEM((tq, heads), jnp.float32),   # running sum l
                pltpu.VMEM((tq, HD), jnp.float32),      # output accumulator
            ],
        ),
        compiler_params=pltpu.CompilerParams(
            dimension_semantics=("parallel", "parallel", "arbitrary"),
            vmem_limit_bytes=_VMEM_LIMIT,
        ),
        cost_estimate=cost,
    )(q, k, v)


# ---------------------------------------------------------------------------
# Module wrapper
# ---------------------------------------------------------------------------

class MultiHeadSelfAttentionPallas:
    def __init__(self, dim, heads=8, dim_head=None, *, key,
                 compute_dtype=jnp.bfloat16):
        self.dim = dim
        self.heads = heads
        self.dim_head = int(dim / heads) if dim_head is None else dim_head
        self._dim = self.dim_head * heads
        self.scale_factor = float(np.log(self.dim_head) ** (-1))
        self.compute_dtype = compute_dtype

        k1, k2 = jax.random.split(key)
        b1 = 1.0 / np.sqrt(dim)
        b2 = 1.0 / np.sqrt(self._dim)
        # Master weights (f32), stored transposed: (in_features, out_features).
        # w_qkv columns follow the original module's '(d k h)' packing.
        self.w_qkv = jax.random.uniform(k1, (dim, 3 * self._dim), jnp.float32, -b1, b1)
        self.w_0 = jax.random.uniform(k2, (self._dim, dim), jnp.float32, -b2, b2)

        # One-time column permutation '(d k h)' -> three head-major '(h d)'
        # slabs, softmax scale folded into w_q, cast to bf16 for the MXU.
        perm = np.arange(3 * self._dim).reshape(self.dim_head, 3, self.heads)
        perm = perm.transpose(1, 2, 0).reshape(3, self._dim)   # (k, h, d) ordering
        self.w_q_c = (self.w_qkv[:, perm[0]] * self.scale_factor).astype(compute_dtype)
        self.w_k_c = self.w_qkv[:, perm[1]].astype(compute_dtype)
        self.w_v_c = self.w_qkv[:, perm[2]].astype(compute_dtype)
        # W_0 already consumes '(h d)'-ordered features: no permutation needed.
        self.w_0_c = self.w_0.astype(compute_dtype)

    def __call__(self, x, mask=None):
        assert x.ndim == 3
        # TODO(synk): optional boolean mask (additive -inf before the online
        # softmax) is not wired into the flash kernel.
        assert mask is None
        B, T, D = x.shape
        assert D == self.dim

        x2d = x.reshape(B * T, D)
        q, k, v = qkv_projection(x2d, self.w_q_c, self.w_k_c, self.w_v_c)
        q = q.reshape(B, T, self._dim)
        k = k.reshape(B, T, self._dim)
        v = v.reshape(B, T, self._dim)

        out = flash_mhsa(q, k, v, self.heads, self.dim_head)

        y = linear_no_bias(out.reshape(B * T, self._dim), self.w_0_c,
                           out_dtype=x.dtype)
        return y.reshape(B, T, self.dim)


# ---------------------------------------------------------------------------
# Pure-JAX reference (original einops semantics, unpermuted f32 weights)
# ---------------------------------------------------------------------------

def reference_mhsa(x, w_qkv, w_0, heads, dim_head, scale):
    B, T, D = x.shape
    hp = lax.Precision.HIGHEST
    qkv = jnp.einsum("btd,de->bte", x, w_qkv, precision=hp)
    qkv = qkv.reshape(B, T, dim_head, 3, heads)
    qkv = jnp.transpose(qkv, (3, 0, 4, 1, 2))      # (3, B, H, T, Dh)
    q, k, v = qkv[0], qkv[1], qkv[2]
    s = jnp.einsum("bhid,bhjd->bhij", q, k, precision=hp) * scale
    p = jax.nn.softmax(s, axis=-1)
    out = jnp.einsum("bhij,bhjd->bhid", p, v, precision=hp)
    out = jnp.transpose(out, (0, 2, 1, 3)).reshape(B, T, heads * dim_head)
    return jnp.einsum("bte,ed->btd", out, w_0, precision=hp)


# ---------------------------------------------------------------------------

if __name__ == "__main__":
    key = jax.random.PRNGKey(0)
    kx, kp = jax.random.split(key)

    B, T, dim, heads = 2, 8, 32, 8   # dim_head defaults to dim/heads = 4

    x = jax.random.normal(kx, (B, T, dim), jnp.float32)
    module = MultiHeadSelfAttentionPallas(dim, heads=heads, key=kp)

    out = jax.block_until_ready(module(x))

    ref = reference_mhsa(
        x, module.w_qkv, module.w_0, module.heads, module.dim_head, module.scale_factor
    )
    assert out.shape == (B, T, dim)
    err = float(jnp.max(jnp.abs(out - ref)))
    # bf16 MXU inputs -> looser tolerance than the f32 reference.
    assert jnp.allclose(out, ref, atol=5e-2, rtol=5e-2), f"max abs err {err}"
    print("KERNEL_OK")
</pallas_src>

<mosaic_0001>
module attributes {stable_mosaic.version = 11 : i64} {
  func.func @_qkv_matmul_kernel(%arg0: i32, %arg1: i32, %arg2: i32, %arg3: memref<16x32xf32, #tpu.memory_space<vmem>>, %arg4: memref<32x32xbf16, #tpu.memory_space<vmem>>, %arg5: memref<32x32xbf16, #tpu.memory_space<vmem>>, %arg6: memref<32x32xbf16, #tpu.memory_space<vmem>>, %arg7: memref<16x32xbf16, #tpu.memory_space<vmem>>, %arg8: memref<16x32xbf16, #tpu.memory_space<vmem>>, %arg9: memref<16x32xbf16, #tpu.memory_space<vmem>>, %arg10: memref<16x32xf32, #tpu.memory_space<vmem>>, %arg11: memref<16x32xf32, #tpu.memory_space<vmem>>, %arg12: memref<16x32xf32, #tpu.memory_space<vmem>>) attributes {dimension_semantics = [#tpu.dimension_semantics<parallel>, #tpu.dimension_semantics<parallel>, #tpu.dimension_semantics<arbitrary>], iteration_bounds = array<i64: 1, 1, 1>, scalar_prefetch = 0 : i64, scratch_operands = 3 : i64, tpu.core_type = #tpu.core_type<tc>, window_params = [{transform_indices = @transform_0, window_bounds = array<i64: 16, 32>}, {transform_indices = @transform_1, window_bounds = array<i64: 32, 32>}, {transform_indices = @transform_2, window_bounds = array<i64: 32, 32>}, {transform_indices = @transform_3, window_bounds = array<i64: 32, 32>}, {transform_indices = @transform_4, window_bounds = array<i64: 16, 32>}, {transform_indices = @transform_5, window_bounds = array<i64: 16, 32>}, {transform_indices = @transform_6, window_bounds = array<i64: 16, 32>}]} {
    %c0_i32 = arith.constant 0 : i32
    %0 = arith.cmpi eq, %arg2, %c0_i32 : i32
    %1 = arith.extui %0 : i1 to i32
    %c0_i32_0 = arith.constant 0 : i32
    %2 = arith.cmpi ne, %1, %c0_i32_0 : i32
    scf.if %2 {
      %cst_24 = arith.constant 0.000000e+00 : f32
      %23 = vector.broadcast %cst_24 : f32 to vector<16x32xf32>
      %c0_25 = arith.constant 0 : index
      %c0_26 = arith.constant 0 : index
      %24 = vector.load %arg10[%c0_25, %c0_26] : memref<16x32xf32, #tpu.memory_space<vmem>>, vector<16x32xf32>
      tpu.vector_store %arg10[%c0_25, %c0_26], %23 {strides = array<i32>} : memref<16x32xf32, #tpu.memory_space<vmem>>, vector<16x32xf32>,
      %cst_27 = arith.constant 0.000000e+00 : f32
      %25 = vector.broadcast %cst_27 : f32 to vector<16x32xf32>
      %c0_28 = arith.constant 0 : index
      %c0_29 = arith.constant 0 : index
      %26 = vector.load %arg11[%c0_28, %c0_29] : memref<16x32xf32, #tpu.memory_space<vmem>>, vector<16x32xf32>
      tpu.vector_store %arg11[%c0_28, %c0_29], %25 {strides = array<i32>} : memref<16x32xf32, #tpu.memory_space<vmem>>, vector<16x32xf32>,
      %cst_30 = arith.constant 0.000000e+00 : f32
      %27 = vector.broadcast %cst_30 : f32 to vector<16x32xf32>
      %c0_31 = arith.constant 0 : index
      %c0_32 = arith.constant 0 : index
      %28 = vector.load %arg12[%c0_31, %c0_32] : memref<16x32xf32, #tpu.memory_space<vmem>>, vector<16x32xf32>
      tpu.vector_store %arg12[%c0_31, %c0_32], %27 {strides = array<i32>} : memref<16x32xf32, #tpu.memory_space<vmem>>, vector<16x32xf32>,
    } else {
    }
    %c0 = arith.constant 0 : index
    %c0_1 = arith.constant 0 : index
    %3 = vector.load %arg3[%c0, %c0_1] : memref<16x32xf32, #tpu.memory_space<vmem>>, vector<16x32xf32>
    %4 = arith.truncf %3 : vector<16x32xf32> to vector<16x32xbf16>
    %c0_2 = arith.constant 0 : index
    %c0_3 = arith.constant 0 : index
    %5 = vector.load %arg10[%c0_2, %c0_3] : memref<16x32xf32, #tpu.memory_space<vmem>>, vector<16x32xf32>
    %c0_4 = arith.constant 0 : index
    %c0_5 = arith.constant 0 : index
    %6 = vector.load %arg4[%c0_4, %c0_5] : memref<32x32xbf16, #tpu.memory_space<vmem>>, vector<32x32xbf16>
    %cst = arith.constant dense<0.000000e+00> : vector<16x32xf32>
    %7 = tpu.matmul %4, %6, %cst {dimension_numbers = #tpu.dot_dimension_numbers<[1], [0], [0], [1], [0, 0, 1, 1], [], []>} : vector<16x32xbf16>, vector<32x32xbf16>, vector<16x32xf32> -> vector<16x32xf32>
    %8 = arith.addf %5, %7 : vector<16x32xf32>
    %c0_6 = arith.constant 0 : index
    %c0_7 = arith.constant 0 : index
    %9 = vector.load %arg10[%c0_6, %c0_7] : memref<16x32xf32, #tpu.memory_space<vmem>>, vector<16x32xf32>
    tpu.vector_store %arg10[%c0_6, %c0_7], %8 {strides = array<i32>} : memref<16x32xf32, #tpu.memory_space<vmem>>, vector<16x32xf32>,
    %c0_8 = arith.constant 0 : index
    %c0_9 = arith.constant 0 : index
    %10 = vector.load %arg11[%c0_8, %c0_9] : memref<16x32xf32, #tpu.memory_space<vmem>>, vector<16x32xf32>
    %c0_10 = arith.constant 0 : index
    %c0_11 = arith.constant 0 : index
    %11 = vector.load %arg5[%c0_10, %c0_11] : memref<32x32xbf16, #tpu.memory_space<vmem>>, vector<32x32xbf16>
    %cst_12 = arith.constant dense<0.000000e+00> : vector<16x32xf32>
    %12 = tpu.matmul %4, %11, %cst_12 {dimension_numbers = #tpu.dot_dimension_numbers<[1], [0], [0], [1], [0, 0, 1, 1], [], []>} : vector<16x32xbf16>, vector<32x32xbf16>, vector<16x32xf32> -> vector<16x32xf32>
    %13 = arith.addf %10, %12 : vector<16x32xf32>
    %c0_13 = arith.constant 0 : index
    %c0_14 = arith.constant 0 : index
    %14 = vector.load %arg11[%c0_13, %c0_14] : memref<16x32xf32, #tpu.memory_space<vmem>>, vector<16x32xf32>
    tpu.vector_store %arg11[%c0_13, %c0_14], %13 {strides = array<i32>} : memref<16x32xf32, #tpu.memory_space<vmem>>, vector<16x32xf32>,
    %c0_15 = arith.constant 0 : index
    %c0_16 = arith.constant 0 : index
    %15 = vector.load %arg12[%c0_15, %c0_16] : memref<16x32xf32, #tpu.memory_space<vmem>>, vector<16x32xf32>
    %c0_17 = arith.constant 0 : index
    %c0_18 = arith.constant 0 : index
    %16 = vector.load %arg6[%c0_17, %c0_18] : memref<32x32xbf16, #tpu.memory_space<vmem>>, vector<32x32xbf16>
    %cst_19 = arith.constant dense<0.000000e+00> : vector<16x32xf32>
    %17 = tpu.matmul %4, %16, %cst_19 {dimension_numbers = #tpu.dot_dimension_numbers<[1], [0], [0], [1], [0, 0, 1, 1], [], []>} : vector<16x32xbf16>, vector<32x32xbf16>, vector<16x32xf32> -> vector<16x32xf32>
    %18 = arith.addf %15, %17 : vector<16x32xf32>
    %c0_20 = arith.constant 0 : index
    %c0_21 = arith.constant 0 : index
    %19 = vector.load %arg12[%c0_20, %c0_21] : memref<16x32xf32, #tpu.memory_space<vmem>>, vector<16x32xf32>
    tpu.vector_store %arg12[%c0_20, %c0_21], %18 {strides = array<i32>} : memref<16x32xf32, #tpu.memory_space<vmem>>, vector<16x32xf32>,
    %c0_i32_22 = arith.constant 0 : i32
    %20 = arith.cmpi eq, %arg2, %c0_i32_22 : i32
    %21 = arith.extui %20 : i1 to i32
    %c0_i32_23 = arith.constant 0 : i32
    %22 = arith.cmpi ne, %21, %c0_i32_23 : i32
    scf.if %22 {
      %c0_24 = arith.constant 0 : index
      %c0_25 = arith.constant 0 : index
      %23 = vector.load %arg10[%c0_24, %c0_25] : memref<16x32xf32, #tpu.memory_space<vmem>>, vector<16x32xf32>
      %24 = arith.truncf %23 : vector<16x32xf32> to vector<16x32xbf16>
      %c0_26 = arith.constant 0 : index
      %c0_27 = arith.constant 0 : index
      %25 = vector.load %arg7[%c0_26, %c0_27] : memref<16x32xbf16, #tpu.memory_space<vmem>>, vector<16x32xbf16>
      tpu.vector_store %arg7[%c0_26, %c0_27], %24 {strides = array<i32>} : memref<16x32xbf16, #tpu.memory_space<vmem>>, vector<16x32xbf16>,
      %c0_28 = arith.constant 0 : index
      %c0_29 = arith.constant 0 : index
      %26 = vector.load %arg11[%c0_28, %c0_29] : memref<16x32xf32, #tpu.memory_space<vmem>>, vector<16x32xf32>
      %27 = arith.truncf %26 : vector<16x32xf32> to vector<16x32xbf16>
      %c0_30 = arith.constant 0 : index
      %c0_31 = arith.constant 0 : index
      %28 = vector.load %arg8[%c0_30, %c0_31] : memref<16x32xbf16, #tpu.memory_space<vmem>>, vector<16x32xbf16>
      tpu.vector_store %arg8[%c0_30, %c0_31], %27 {strides = array<i32>} : memref<16x32xbf16, #tpu.memory_space<vmem>>, vector<16x32xbf16>,
      %c0_32 = arith.constant 0 : index
      %c0_33 = arith.constant 0 : index
      %29 = vector.load %arg12[%c0_32, %c0_33] : memref<16x32xf32, #tpu.memory_space<vmem>>, vector<16x32xf32>
      %30 = arith.truncf %29 : vector<16x32xf32> to vector<16x32xbf16>
      %c0_34 = arith.constant 0 : index
      %c0_35 = arith.constant 0 : index
      %31 = vector.load %arg9[%c0_34, %c0_35] : memref<16x32xbf16, #tpu.memory_space<vmem>>, vector<16x32xbf16>
      tpu.vector_store %arg9[%c0_34, %c0_35], %30 {strides = array<i32>} : memref<16x32xbf16, #tpu.memory_space<vmem>>, vector<16x32xbf16>,
    } else {
    }
    return
  }
  func.func @transform_0(%arg0: i32, %arg1: i32, %arg2: i32) -> (i32, i32) {
    %c0_i32 = arith.constant 0 : i32
    return %arg0, %arg2 : i32, i32
  }
  func.func @transform_1(%arg0: i32, %arg1: i32, %arg2: i32) -> (i32, i32) {
    %c0_i32 = arith.constant 0 : i32
    return %arg2, %arg1 : i32, i32
  }
  func.func @transform_2(%arg0: i32, %arg1: i32, %arg2: i32) -> (i32, i32) {
    %c0_i32 = arith.constant 0 : i32
    return %arg2, %arg1 : i32, i32
  }
  func.func @transform_3(%arg0: i32, %arg1: i32, %arg2: i32) -> (i32, i32) {
    %c0_i32 = arith.constant 0 : i32
    return %arg2, %arg1 : i32, i32
  }
  func.func @transform_4(%arg0: i32, %arg1: i32, %arg2: i32) -> (i32, i32) {
    %c0_i32 = arith.constant 0 : i32
    return %arg0, %arg1 : i32, i32
  }
  func.func @transform_5(%arg0: i32, %arg1: i32, %arg2: i32) -> (i32, i32) {
    %c0_i32 = arith.constant 0 : i32
    return %arg0, %arg1 : i32, i32
  }
  func.func @transform_6(%arg0: i32, %arg1: i32, %arg2: i32) -> (i32, i32) {
    %c0_i32 = arith.constant 0 : i32
    return %arg0, %arg1 : i32, i32
  }
}

</mosaic_0001>

<llo_original>
// kernel: tpu_custom_call.1
$region0: #{tpu_custom_call.1}
  #allocation0 [shape = 'u32[]', space=smem, size = 0x4, offset = 0x4, fixed_abs, tag = 'smem constant byte address 0x4 - core index']
  #allocation1 [shape = 'u32[144,128]{1,0:T(1,128)}', space=vmem, size = 0x12000, scoped, tag = 'internal scratch']
  #allocation2 [shape = 'f32[16,32]{1,0:T(8,128)}', space=vmem, size = 0x2000, scoped, tag = 'scratch operand']
  #allocation3 [shape = 'f32[16,32]{1,0:T(8,128)}', space=vmem, size = 0x2000, scoped, tag = 'scratch operand']
  #allocation4 [shape = 'f32[16,32]{1,0:T(8,128)}', space=vmem, size = 0x2000, scoped, tag = 'scratch operand']
  %s0 = inlined_call_operand.hbm [shape: f32[16,32], index: 0, kind: input, shape index: {}]
  %s1 = inlined_call_operand.hbm [shape: bf16[32,32], index: 1, kind: input, shape index: {}]
  %s2 = inlined_call_operand.hbm [shape: bf16[32,32], index: 2, kind: input, shape index: {}]
  %s3 = inlined_call_operand.hbm [shape: bf16[32,32], index: 3, kind: input, shape index: {}]
  %s4 = inlined_call_operand.hbm [shape: bf16[16,32], index: 4, kind: output, shape index: {0}]
  %s5 = inlined_call_operand.hbm [shape: bf16[16,32], index: 5, kind: output, shape index: {1}]
  %s6 = inlined_call_operand.hbm [shape: bf16[16,32], index: 6, kind: output, shape index: {2}]
  %7 = xla_tuple %s4, %s5, %s6
  %s8 = sld [smem:[#allocation0]]
  $region66: #{tpu_custom_call.1} parent=0
    _
  %s10 = ssub.s32 1, %s8
  %s11 = scalar_select 0, %s10, %s8
  $region1: #{tpu_custom_call.1} parent=0
    #allocation5 [shape = 'u8[8192]{0}', space=vmem, size = 0x2000, scoped, tag = 'input window, operand 0, single buffered']
    #allocation6 [shape = 's32[1]{0}', space=sflag, size = 0x4, scoped, tag = 'scoped memory for tpu_custom_call.1']
    #allocation7 [shape = 's32[1]{0}', space=sflag, size = 0x4, scoped, tag = 'scoped memory for tpu_custom_call.1']
    #allocation8 [shape = 'u8[8192]{0}', space=vmem, size = 0x2000, scoped, tag = 'input window, operand 1, single buffered']
    #allocation9 [shape = 's32[1]{0}', space=sflag, size = 0x4, scoped, tag = 'scoped memory for tpu_custom_call.1']
    #allocation10 [shape = 'u8[8192]{0}', space=vmem, size = 0x2000, scoped, tag = 'input window, operand 2, single buffered']
    #allocation11 [shape = 'u8[8192]{0}', space=vmem, size = 0x2000, scoped, tag = 'input window, operand 3, single buffered']
    #allocation12 [shape = 's32[1]{0}', space=sflag, size = 0x4, scoped, tag = 'scoped memory for tpu_custom_call.1']
    #allocation13 [shape = 'u8[4096]{0}', space=vmem, size = 0x1000, scoped, tag = 'output window, operand 0, single buffered']
    #allocation14 [shape = 'u8[4096]{0}', space=vmem, size = 0x1000, scoped, tag = 'output window, operand 1, single buffered']
    #allocation15 [shape = 's32[1]{0}', space=sflag, size = 0x4, scoped, tag = 'scoped memory for tpu_custom_call.1']
    #allocation16 [shape = 'u8[4096]{0}', space=vmem, size = 0x1000, scoped, tag = 'output window, operand 2, single buffered']
    %12 = vsyncpa [#allocation6], 0
    %13 = vsyncpa [#allocation9], 0
    %14 = vsyncpa [#allocation12], 0
    %15 = vsyncpa [#allocation7], 0
    %16 = vsyncpa [#allocation15], 0
    // Predicated region
    $region2: #{tpu_custom_call.1} parent=1 // pred_check
      _
    $region3: #{tpu_custom_call.1} parent=1 // pred_check_branch
      %18 = sbr.rel (0) target = $region5
    $region4: #{tpu_custom_call.1} parent=1 // pred_region
      %s20 = ssub.s32 256, 256
      %21 = vsyncadd [#allocation6], %s20
      %s22 = sshll.u32 [#allocation5], 4
      %s23 = int_to_ptr.vmem [resolvable:$true] %s22
      %28 = dma.hbm_to_vmem [thread:$0]  %s0, 256, %s23, [#allocation6], 128, 128, 8
    $region5: #{tpu_custom_call.1} parent=1 // pred_fallthru
      _
    // Predicated region
    $region6: #{tpu_custom_call.1} parent=1 // pred_check
      _
    $region7: #{tpu_custom_call.1} parent=1 // pred_check_branch
      %30 = sbr.rel (0) target = $region9
    $region8: #{tpu_custom_call.1} parent=1 // pred_region
      %s32 = ssub.s32 256, 256
      %33 = vsyncadd [#allocation9], %s32
      %s34 = sshll.u32 [#allocation8], 4
      %s35 = int_to_ptr.vmem [resolvable:$true] %s34
      %40 = dma.hbm_to_vmem [thread:$0]  %s1, 256, %s35, [#allocation9], 64, 64, 4
    $region9: #{tpu_custom_call.1} parent=1 // pred_fallthru
      _
    // Predicated region
    $region10: #{tpu_custom_call.1} parent=1 // pred_check
      _
    $region11: #{tpu_custom_call.1} parent=1 // pred_check_branch
      %42 = sbr.rel (0) target = $region13
    $region12: #{tpu_custom_call.1} parent=1 // pred_region
      %s44 = ssub.s32 256, 256
      %45 = vsyncadd [#allocation9], %s44
      %s46 = sshll.u32 [#allocation10], 4
      %s47 = int_to_ptr.vmem [resolvable:$true] %s46
      %52 = dma.hbm_to_vmem [thread:$0]  %s2, 256, %s47, [#allocation9], 64, 64, 4
    $region13: #{tpu_custom_call.1} parent=1 // pred_fallthru
      _
    // Predicated region
    $region14: #{tpu_custom_call.1} parent=1 // pred_check
      _
    $region15: #{tpu_custom_call.1} parent=1 // pred_check_branch
      %54 = sbr.rel (0) target = $region17
    $region16: #{tpu_custom_call.1} parent=1 // pred_region
      %s56 = ssub.s32 256, 256
      %57 = vsyncadd [#allocation12], %s56
      %s58 = sshll.u32 [#allocation11], 4
      %s59 = int_to_ptr.vmem [resolvable:$true] %s58
      %64 = dma.hbm_to_vmem [thread:$0]  %s3, 256, %s59, [#allocation12], 64, 64, 4
    $region17: #{tpu_custom_call.1} parent=1 // pred_fallthru
      _
    // Predicated region
    $region18: #{tpu_custom_call.1} parent=1 // pred_check
      _
    $region19: #{tpu_custom_call.1} parent=1 // pred_check_branch
      %66 = sbr.rel (0) target = $region21
    $region20: #{tpu_custom_call.1} parent=1 // pred_region
      %67 = dma.done [#allocation6], 256
    $region21: #{tpu_custom_call.1} parent=1 // pred_fallthru
      _
    // Predicated region
    $region22: #{tpu_custom_call.1} parent=1 // pred_check
      _
    $region23: #{tpu_custom_call.1} parent=1 // pred_check_branch
      %69 = sbr.rel (0) target = $region25
    $region24: #{tpu_custom_call.1} parent=1 // pred_region
      %70 = dma.done [#allocation9], 256
    $region25: #{tpu_custom_call.1} parent=1 // pred_fallthru
      _
    // Predicated region
    $region26: #{tpu_custom_call.1} parent=1 // pred_check
      _
    $region27: #{tpu_custom_call.1} parent=1 // pred_check_branch
      %72 = sbr.rel (0) target = $region29
    $region28: #{tpu_custom_call.1} parent=1 // pred_region
      %73 = dma.done [#allocation9], 256
    $region29: #{tpu_custom_call.1} parent=1 // pred_fallthru
      _
    // Predicated region
    $region30: #{tpu_custom_call.1} parent=1 // pred_check
      _
    $region31: #{tpu_custom_call.1} parent=1 // pred_check_branch
      %75 = sbr.rel (0) target = $region33
    $region32: #{tpu_custom_call.1} parent=1 // pred_region
      %76 = dma.done [#allocation12], 256
    $region33: #{tpu_custom_call.1} parent=1 // pred_fallthru
      _
    %p78 = scmp.eq.s32.totalorder 0, 0
    // Predicated region
    $region34: #{tpu_custom_call.1} parent=1 // pred_check
      %p79 = pneg %p78
    $region35: #{tpu_custom_call.1} parent=1 // pred_check_branch
      %81 = sbr.rel (%p79) target = $region37
    $region36: #{tpu_custom_call.1} parent=1 // pred_region
      %vm82 = vcmask 261120
      %83 = vst.msk [vmem:[#allocation2] sm:$0xff] %vm82, 0.0
      %84 = vst.msk [vmem:[#allocation2 + $0x8] sm:$0xff] %vm82, 0.0
      %85 = vst.msk [vmem:[#allocation3] sm:$0xff] %vm82, 0.0
      %86 = vst.msk [vmem:[#allocation3 + $0x8] sm:$0xff] %vm82, 0.0
      %87 = vst.msk [vmem:[#allocation4] sm:$0xff] %vm82, 0.0
      %88 = vst.msk [vmem:[#allocation4 + $0x8] sm:$0xff] %vm82, 0.0
    $region37: #{tpu_custom_call.1} parent=1 // pred_fallthru
      _
    %v89 = vld [vmem:[#allocation5] sm:$0xff]
    %v90 = vld [vmem:[#allocation5 + $0x8] sm:$0xff]
    %v91 = vpack.c.bf16 %v90, %v89
    %v92 = vld [vmem:[#allocation2] sm:$0xff]
    %v93 = vld [vmem:[#allocation2 + $0x8] sm:$0xff]
    %v94 = vld [vmem:[#allocation8] sm:$0xf]
    %v95 = vld [vmem:[#allocation8 + $0x4] sm:$0xf]
    %v96 = vld [vmem:[#allocation8 + $0x8] sm:$0xf]
    %v97 = vld [vmem:[#allocation8 + $0xc] sm:$0xf]
    %v102 = vunpack.c.l.b16 %v94
    %v103 = vunpack.c.l.b16 %v95
    %v104 = vunpack.c.l.b16 %v96
    %v105 = vunpack.c.l.b16 %v97
    %v106 = vpack.c.b16 %v103, %v102
    %v107 = vpack.c.b16 %v105, %v104
    %vm110 = vcmask 261120
    %v112 = vsel %vm110, %v91, 0
    %114 = vmatprep.subr.bf16.mxu0 0
    %115 = vmatpush1.bf16.msra.mxu0 %v106
    %116 = vmatprep.subr.bf16.mxu0 0
    %117 = vmatpush1.bf16.msra.mxu0 %v107
    %118 = vmatprep.subr.bf16.mxu0 0
    %119 = vmatpush1.bf16.msra.mxu0 0
    %120 = vmatprep.subr.bf16.mxu0 0
    %121 = vmatpush1.bf16.msra.mxu0 0
    %122 = vmatprep.subr.bf16.mxu0 0
    %123 = vmatpush1.bf16.msra.mxu0 0
    %124 = vmatprep.subr.bf16.mxu0 0
    %125 = vmatpush1.bf16.msra.mxu0 0
    %126 = vmatprep.subr.bf16.mxu0 0
    %127 = vmatpush1.bf16.msra.mxu0 0
    %128 = vmatprep.subr.bf16.mxu0 0
    %129 = vmatpush1.bf16.msra.mxu0 0
    %130 = vmatprep.subr.bf16.mxu0 0
    %131 = vmatpush1.bf16.msra.mxu0 0
    %132 = vmatprep.subr.bf16.mxu0 0
    %133 = vmatpush1.bf16.msra.mxu0 0
    %134 = vmatprep.subr.bf16.mxu0 0
    %135 = vmatpush1.bf16.msra.mxu0 0
    %136 = vmatprep.subr.bf16.mxu0 0
    %137 = vmatpush1.bf16.msra.mxu0 0
    %138 = vmatprep.subr.bf16.mxu0 0
    %139 = vmatpush1.bf16.msra.mxu0 0
    %140 = vmatprep.subr.bf16.mxu0 0
    %141 = vmatpush1.bf16.msra.mxu0 0
    %142 = vmatprep.subr.bf16.mxu0 0
    %143 = vmatpush1.bf16.msra.mxu0 0
    %144 = vmatprep.subr.bf16.mxu0 0
    %145 = vmatpush1.bf16.msra.mxu0 0
    %146 = vmatprep.mubr.bf16.mxu0 0
    %147 = vmatmul.mubr.bf16.gmra.mrb[0].mxu0 %v112
    %v148 = vpop.f32.mrb[0].mxu0
    %v149 = vadd.f32 0.0, %v148
    %v150 = vpop.f32.mrb[0].mxu0
    %v151 = vpop.f32.mrb[0].mxu0
    %v152 = vadd.f32 0.0, %v151
    %v153 = vpop.f32.mrb[0].mxu0
    %154 = vdwg.mxu0
    %v155 = vadd.f32 %v92, %v149
    %v156 = vadd.f32 %v93, %v152
    %157 = vst.msk [vmem:[#allocation2] sm:$0xff] %vm110, %v155
    %158 = vst.msk [vmem:[#allocation2 + $0x8] sm:$0xff] %vm110, %v156
    %v159 = vld [vmem:[#allocation3] sm:$0xff]
    %v160 = vld [vmem:[#allocation3 + $0x8] sm:$0xff]
    %v161 = vld [vmem:[#allocation10] sm:$0xf]
    %v162 = vld [vmem:[#allocation10 + $0x4] sm:$0xf]
    %v163 = vld [vmem:[#allocation10 + $0x8] sm:$0xf]
    %v164 = vld [vmem:[#allocation10 + $0xc] sm:$0xf]
    %v169 = vunpack.c.l.b16 %v161
    %v170 = vunpack.c.l.b16 %v162
    %v171 = vunpack.c.l.b16 %v163
    %v172 = vunpack.c.l.b16 %v164
    %v173 = vpack.c.b16 %v170, %v169
    %v174 = vpack.c.b16 %v172, %v171
    %177 = vmatprep.subr.bf16.mxu0 0
    %178 = vmatpush1.bf16.msra.mxu0 %v173
    %179 = vmatprep.subr.bf16.mxu0 0
    %180 = vmatpush1.bf16.msra.mxu0 %v174
    %181 = vmatprep.subr.bf16.mxu0 0
    %182 = vmatpush1.bf16.msra.mxu0 0
    %183 = vmatprep.subr.bf16.mxu0 0
    %184 = vmatpush1.bf16.msra.mxu0 0
    %185 = vmatprep.subr.bf16.mxu0 0
    %186 = vmatpush1.bf16.msra.mxu0 0
    %187 = vmatprep.subr.bf16.mxu0 0
    %188 = vmatpush1.bf16.msra.mxu0 0
    %189 = vmatprep.subr.bf16.mxu0 0
    %190 = vmatpush1.bf16.msra.mxu0 0
    %191 = vmatprep.subr.bf16.mxu0 0
    %192 = vmatpush1.bf16.msra.mxu0 0
    %193 = vmatprep.subr.bf16.mxu0 0
    %194 = vmatpush1.bf16.msra.mxu0 0
    %195 = vmatprep.subr.bf16.mxu0 0
    %196 = vmatpush1.bf16.msra.mxu0 0
    %197 = vmatprep.subr.bf16.mxu0 0
    %198 = vmatpush1.bf16.msra.mxu0 0
    %199 = vmatprep.subr.bf16.mxu0 0
    %200 = vmatpush1.bf16.msra.mxu0 0
    %201 = vmatprep.subr.bf16.mxu0 0
    %202 = vmatpush1.bf16.msra.mxu0 0
    %203 = vmatprep.subr.bf16.mxu0 0
    %204 = vmatpush1.bf16.msra.mxu0 0
    %205 = vmatprep.subr.bf16.mxu0 0
    %206 = vmatpush1.bf16.msra.mxu0 0
    %207 = vmatprep.subr.bf16.mxu0 0
    %208 = vmatpush1.bf16.msra.mxu0 0
    %209 = vmatprep.mubr.bf16.mxu0 0
    %210 = vmatmul.mubr.bf16.gmra.mrb[0].mxu0 %v112
    %v211 = vpop.f32.mrb[0].mxu0
    %v212 = vadd.f32 0.0, %v211
    %v213 = vpop.f32.mrb[0].mxu0
    %v214 = vpop.f32.mrb[0].mxu0
    %v215 = vadd.f32 0.0, %v214
    %v216 = vpop.f32.mrb[0].mxu0
    %217 = vdwg.mxu0
    %v218 = vadd.f32 %v159, %v212
    %v219 = vadd.f32 %v160, %v215
    %220 = vst.msk [vmem:[#allocation3] sm:$0xff] %vm110, %v218
    %221 = vst.msk [vmem:[#allocation3 + $0x8] sm:$0xff] %vm110, %v219
    %v222 = vld [vmem:[#allocation4] sm:$0xff]
    %v223 = vld [vmem:[#allocation4 + $0x8] sm:$0xff]
    %v224 = vld [vmem:[#allocation11] sm:$0xf]
    %v225 = vld [vmem:[#allocation11 + $0x4] sm:$0xf]
    %v226 = vld [vmem:[#allocation11 + $0x8] sm:$0xf]
    %v227 = vld [vmem:[#allocation11 + $0xc] sm:$0xf]
    %v232 = vunpack.c.l.b16 %v224
    %v233 = vunpack.c.l.b16 %v225
    %v234 = vunpack.c.l.b16 %v226
    %v235 = vunpack.c.l.b16 %v227
    %v236 = vpack.c.b16 %v233, %v232
    %v237 = vpack.c.b16 %v235, %v234
    %240 = vmatprep.subr.bf16.mxu0 0
    %241 = vmatpush1.bf16.msra.mxu0 %v236
    %242 = vmatprep.subr.bf16.mxu0 0
    %243 = vmatpush1.bf16.msra.mxu0 %v237
    %244 = vmatprep.subr.bf16.mxu0 0
    %245 = vmatpush1.bf16.msra.mxu0 0
    %246 = vmatprep.subr.bf16.mxu0 0
    %247 = vmatpush1.bf16.msra.mxu0 0
    %248 = vmatprep.subr.bf16.mxu0 0
    %249 = vmatpush1.bf16.msra.mxu0 0
    %250 = vmatprep.subr.bf16.mxu0 0
    %251 = vmatpush1.bf16.msra.mxu0 0
    %252 = vmatprep.subr.bf16.mxu0 0
    %253 = vmatpush1.bf16.msra.mxu0 0
    %254 = vmatprep.subr.bf16.mxu0 0
    %255 = vmatpush1.bf16.msra.mxu0 0
    %256 = vmatprep.subr.bf16.mxu0 0
    %257 = vmatpush1.bf16.msra.mxu0 0
    %258 = vmatprep.subr.bf16.mxu0 0
    %259 = vmatpush1.bf16.msra.mxu0 0
    %260 = vmatprep.subr.bf16.mxu0 0
    %261 = vmatpush1.bf16.msra.mxu0 0
    %262 = vmatprep.subr.bf16.mxu0 0
    %263 = vmatpush1.bf16.msra.mxu0 0
    %264 = vmatprep.subr.bf16.mxu0 0
    %265 = vmatpush1.bf16.msra.mxu0 0
    %266 = vmatprep.subr.bf16.mxu0 0
    %267 = vmatpush1.bf16.msra.mxu0 0
    %268 = vmatprep.subr.bf16.mxu0 0
    %269 = vmatpush1.bf16.msra.mxu0 0
    %270 = vmatprep.subr.bf16.mxu0 0
    %271 = vmatpush1.bf16.msra.mxu0 0
    %272 = vmatprep.mubr.bf16.mxu0 0
    %273 = vmatmul.mubr.bf16.gmra.mrb[0].mxu0 %v112
    %v274 = vpop.f32.mrb[0].mxu0
    %v275 = vadd.f32 0.0, %v274
    %v276 = vpop.f32.mrb[0].mxu0
    %v277 = vpop.f32.mrb[0].mxu0
    %v278 = vadd.f32 0.0, %v277
    %v279 = vpop.f32.mrb[0].mxu0
    %280 = vdwg.mxu0
    %v281 = vadd.f32 %v222, %v275
    %v282 = vadd.f32 %v223, %v278
    %283 = vst.msk [vmem:[#allocation4] sm:$0xff] %vm110, %v281
    %284 = vst.msk [vmem:[#allocation4 + $0x8] sm:$0xff] %vm110, %v282
    // Predicated region
    $region38: #{tpu_custom_call.1} parent=1 // pred_check
      %p285 = pneg %p78
    $region39: #{tpu_custom_call.1} parent=1 // pred_check_branch
      %287 = sbr.rel (%p285) target = $region41
    $region40: #{tpu_custom_call.1} parent=1 // pred_region
      %v288 = vld [vmem:[#allocation2] sm:$0xff]
      %v289 = vld [vmem:[#allocation2 + $0x8] sm:$0xff]
      %v290 = vpack.c.bf16 %v289, %v288
      %v292 = vunpack.c.l.b16 %v290
      %v293 = vunpack.c.h.b16 %v290
      %v294 = vpack.c.b16 %v292, %v292
      %v295 = vpack.c.b16 %v293, %v293
      %vm298 = vcmask 257024
      %299 = vst.msk [vmem:[#allocation13] sm:$0xf] %vm298, %v294
      %300 = vst.msk [vmem:[#allocation13 + $0x4] sm:$0xf] %vm298, %v295
      %v301 = vld [vmem:[#allocation3] sm:$0xff]
      %v302 = vld [vmem:[#allocation3 + $0x8] sm:$0xff]
      %v303 = vpack.c.bf16 %v302, %v301
      %v305 = vunpack.c.l.b16 %v303
      %v306 = vunpack.c.h.b16 %v303
      %v307 = vpack.c.b16 %v305, %v305
      %v308 = vpack.c.b16 %v306, %v306
      %311 = vst.msk [vmem:[#allocation14] sm:$0xf] %vm298, %v307
      %312 = vst.msk [vmem:[#allocation14 + $0x4] sm:$0xf] %vm298, %v308
      %v313 = vld [vmem:[#allocation4] sm:$0xff]
      %v314 = vld [vmem:[#allocation4 + $0x8] sm:$0xff]
      %v315 = vpack.c.bf16 %v314, %v313
      %v317 = vunpack.c.l.b16 %v315
      %v318 = vunpack.c.h.b16 %v315
      %v319 = vpack.c.b16 %v317, %v317
      %v320 = vpack.c.b16 %v318, %v318
      %323 = vst.msk [vmem:[#allocation16] sm:$0xf] %vm298, %v319
      %324 = vst.msk [vmem:[#allocation16 + $0x4] sm:$0xf] %vm298, %v320
    $region41: #{tpu_custom_call.1} parent=1 // pred_fallthru
      _
    // Predicated region
    $region42: #{tpu_custom_call.1} parent=1 // pred_check
      _
    $region43: #{tpu_custom_call.1} parent=1 // pred_check_branch
      %326 = sbr.rel (0) target = $region45
    $region44: #{tpu_custom_call.1} parent=1 // pred_region
      %s328 = ssub.s32 128, 128
      %329 = vsyncadd [#allocation7], %s328
      %s330 = sshll.u32 [#allocation13], 4
      %s331 = int_to_ptr.vmem [resolvable:$true] %s330
      %336 = dma.vmem_to_hbm [thread:$0]  %s331, 128, %s4, [#allocation7], 64, 64, 4
    $region45: #{tpu_custom_call.1} parent=1 // pred_fallthru
      _
    // Predicated region
    $region46: #{tpu_custom_call.1} parent=1 // pred_check
      _
    $region47: #{tpu_custom_call.1} parent=1 // pred_check_branch
      %338 = sbr.rel (0) target = $region49
    $region48: #{tpu_custom_call.1} parent=1 // pred_region
      %s340 = ssub.s32 128, 128
      %341 = vsyncadd [#allocation15], %s340
      %s342 = sshll.u32 [#allocation14], 4
      %s343 = int_to_ptr.vmem [resolvable:$true] %s342
      %348 = dma.vmem_to_hbm [thread:$0]  %s343, 128, %s5, [#allocation15], 64, 64, 4
    $region49: #{tpu_custom_call.1} parent=1 // pred_fallthru
      _
    // Predicated region
    $region50: #{tpu_custom_call.1} parent=1 // pred_check
      _
    $region51: #{tpu_custom_call.1} parent=1 // pred_check_branch
      %350 = sbr.rel (0) target = $region53
    $region52: #{tpu_custom_call.1} parent=1 // pred_region
      %s352 = ssub.s32 128, 128
      %353 = vsyncadd [#allocation15], %s352
      %s354 = sshll.u32 [#allocation16], 4
      %s355 = int_to_ptr.vmem [resolvable:$true] %s354
      %360 = dma.vmem_to_hbm [thread:$0]  %s355, 128, %s6, [#allocation15], 64, 64, 4
    $region53: #{tpu_custom_call.1} parent=1 // pred_fallthru
      _
    // Predicated region
    $region54: #{tpu_custom_call.1} parent=1 // pred_check
      _
    $region55: #{tpu_custom_call.1} parent=1 // pred_check_branch
      %362 = sbr.rel (0) target = $region57
    $region56: #{tpu_custom_call.1} parent=1 // pred_region
      %363 = dma.done [#allocation7], 128
    $region57: #{tpu_custom_call.1} parent=1 // pred_fallthru
      _
    // Predicated region
    $region58: #{tpu_custom_call.1} parent=1 // pred_check
      _
    $region59: #{tpu_custom_call.1} parent=1 // pred_check_branch
      %365 = sbr.rel (0) target = $region61
    $region60: #{tpu_custom_call.1} parent=1 // pred_region
      %366 = dma.done [#allocation15], 128
    $region61: #{tpu_custom_call.1} parent=1 // pred_fallthru
      _
    // Predicated region
    $region62: #{tpu_custom_call.1} parent=1 // pred_check
      _
    $region63: #{tpu_custom_call.1} parent=1 // pred_check_branch
      %368 = sbr.rel (0) target = $region65
    $region64: #{tpu_custom_call.1} parent=1 // pred_region
      %369 = dma.done [#allocation15], 128
    $region65: #{tpu_custom_call.1} parent=1 // pred_fallthru
      _
    %370 = vsyncpa [#allocation6], 1
    %371 = vsyncpa [#allocation9], 1
    %372 = vsyncpa [#allocation12], 1
    %373 = vsyncpa [#allocation7], 1
    %374 = vsyncpa [#allocation15], 1

</llo_original>
